<compile_context>
chip_gen: v7x
topology: tpu7x:2x2x1
jax: 0.10.0
libtpu: 0.0.40
codegen_flags: <defaults>
</compile_context>

<pallas_src>
import functools

import jax
import jax.numpy as jnp
from jax.experimental import pallas as pl
from jax.experimental.pallas import tpu as pltpu

LANE = 128      # TPU vreg lane width (last dim)
SUBLANE = 8     # TPU vreg sublane width (second-to-last dim)


def _round_up(x: int, mult: int) -> int:
    return (x + mult - 1) // mult * mult


def encoder_decoder_kernel(x_ref, w1_ref, b1_ref, w2_ref, b2_ref, w3_ref, b3_ref, o_ref):
    """Fused 3-layer MLP on one batch tile: relu(x@W1+b1) -> relu(.@W2+b2) -> .@W3+b3."""
    x = x_ref[...]
    h1 = jnp.dot(x, w1_ref[...], preferred_element_type=jnp.float32) + b1_ref[...]
    h1 = jnp.maximum(h1, 0.0)
    h2 = jnp.dot(h1, w2_ref[...], preferred_element_type=jnp.float32) + b2_ref[...]
    h2 = jnp.maximum(h2, 0.0)
    o_ref[...] = jnp.dot(h2, w3_ref[...], preferred_element_type=jnp.float32) + b3_ref[...]


@functools.partial(jax.jit, static_argnames=("block_batch",))
def encoder_decoder(x, w1, b1, w2, b2, w3, b3, *, block_batch=4096):
    """x: (B, n+1) f32; weights (in, out); biases (1, out). Returns (B, n) f32."""
    batch, d_in = x.shape
    m = w1.shape[1]
    n_out = w3.shape[1]

    # --- pad feature dims to lane width, batch to the tile size ------------
    d_in_p = _round_up(d_in, LANE)
    m_p = _round_up(m, LANE)
    n_out_p = _round_up(n_out, LANE)

    tb = min(block_batch, _round_up(batch, SUBLANE))
    tb = _round_up(tb, SUBLANE)
    batch_p = _round_up(batch, tb)

    xp = jnp.pad(x, ((0, batch_p - batch), (0, d_in_p - d_in)))
    w1p = jnp.pad(w1, ((0, d_in_p - d_in), (0, m_p - m)))
    b1p = jnp.pad(b1, ((0, 0), (0, m_p - m)))
    w2p = jnp.pad(w2, ((0, m_p - m), (0, m_p - m)))
    b2p = jnp.pad(b2, ((0, 0), (0, m_p - m)))
    w3p = jnp.pad(w3, ((0, m_p - m), (0, n_out_p - n_out)))
    b3p = jnp.pad(b3, ((0, 0), (0, n_out_p - n_out)))

    grid = (batch_p // tb,)

    # x / out tiles walk the batch axis; weights & biases are VMEM-resident
    # (constant block index across the grid).
    x_spec = pl.BlockSpec((tb, d_in_p), lambda i: (i, 0))
    out_spec = pl.BlockSpec((tb, n_out_p), lambda i: (i, 0))

    def resident(shape):
        return pl.BlockSpec(shape, lambda i: (0, 0))

    flops = 2 * batch_p * (d_in_p * m_p + m_p * m_p + m_p * n_out_p)
    bytes_accessed = 4 * (
        batch_p * (d_in_p + n_out_p)                      # x in + out written
        + d_in_p * m_p + m_p * m_p + m_p * n_out_p        # weights
        + 2 * m_p + n_out_p                               # biases
    )

    out_p = pl.pallas_call(
        encoder_decoder_kernel,
        out_shape=jax.ShapeDtypeStruct((batch_p, n_out_p), jnp.float32),
        grid=grid,
        in_specs=[
            x_spec,
            resident((d_in_p, m_p)),
            resident((1, m_p)),
            resident((m_p, m_p)),
            resident((1, m_p)),
            resident((m_p, n_out_p)),
            resident((1, n_out_p)),
        ],
        out_specs=out_spec,
        compiler_params=pltpu.CompilerParams(
            dimension_semantics=("parallel",),
        ),
        cost_estimate=pl.CostEstimate(
            flops=flops, transcendentals=0, bytes_accessed=bytes_accessed
        ),
    )(xp, w1p, b1p, w2p, b2p, w3p, b3p)

    # Strip batch / lane padding outside the kernel.
    return out_p[:batch, :n_out]


def init_linear_params(key, in_features, out_features):
    """Mimics torch.nn.Linear default init (uniform +-1/sqrt(fan_in)).
    Returns weight already transposed to (in_features, out_features), bias (1, out)."""
    k_w, k_b = jax.random.split(key)
    bound = 1.0 / jnp.sqrt(jnp.float32(in_features))
    w = jax.random.uniform(k_w, (in_features, out_features), jnp.float32, -bound, bound)
    b = jax.random.uniform(k_b, (1, out_features), jnp.float32, -bound, bound)
    return w, b


if __name__ == "__main__":
    # Module hyperparameter: n (m = n // 10).  Small shapes consistent with the module.
    n = 80
    m = n // 10          # = 8
    batch = 8

    key = jax.random.PRNGKey(0)
    k_x, k1, k2, k3 = jax.random.split(key, 4)

    # Input: (batch, n + 1), matching nn.Linear(n + 1, m)'s expected last dim.
    x = jax.random.normal(k_x, (batch, n + 1), dtype=jnp.float32)

    w1, b1 = init_linear_params(k1, n + 1, m)   # encoder: (n+1) -> m
    w2, b2 = init_linear_params(k2, m, m)       # hidden:  m -> m
    w3, b3 = init_linear_params(k3, m, n)       # decoder: m -> n

    out = encoder_decoder(x, w1, b1, w2, b2, w3, b3)
    out = jax.block_until_ready(out)

    # Pure-JAX reference (unpadded, f32) for a sanity check of the fused kernel.
    ref = jnp.maximum(x @ w1 + b1, 0.0)
    ref = jnp.maximum(ref @ w2 + b2, 0.0)
    ref = ref @ w3 + b3
    assert out.shape == (batch, n)
    assert jnp.allclose(out, ref, atol=1e-5, rtol=1e-5)

    print("KERNEL_OK")
</pallas_src>

<mosaic_0001>
module attributes {stable_mosaic.version = 11 : i64} {
  func.func @encoder_decoder_kernel(%arg0: i32, %arg1: memref<8x128xf32, #tpu.memory_space<vmem>>, %arg2: memref<128x128xf32, #tpu.memory_space<vmem>>, %arg3: memref<1x128xf32, #tpu.memory_space<vmem>>, %arg4: memref<128x128xf32, #tpu.memory_space<vmem>>, %arg5: memref<1x128xf32, #tpu.memory_space<vmem>>, %arg6: memref<128x128xf32, #tpu.memory_space<vmem>>, %arg7: memref<1x128xf32, #tpu.memory_space<vmem>>, %arg8: memref<8x128xf32, #tpu.memory_space<vmem>>) attributes {dimension_semantics = [#tpu.dimension_semantics<parallel>], iteration_bounds = array<i64: 1>, scalar_prefetch = 0 : i64, scratch_operands = 0 : i64, tpu.core_type = #tpu.core_type<tc>, window_params = [{transform_indices = @transform_0, window_bounds = array<i64: 8, 128>}, {pipeline_mode = #tpu.pipeline_mode<synchronous>, transform_indices = @transform_1, window_bounds = array<i64: 128, 128>}, {pipeline_mode = #tpu.pipeline_mode<synchronous>, transform_indices = @transform_2, window_bounds = array<i64: 1, 128>}, {pipeline_mode = #tpu.pipeline_mode<synchronous>, transform_indices = @transform_3, window_bounds = array<i64: 128, 128>}, {pipeline_mode = #tpu.pipeline_mode<synchronous>, transform_indices = @transform_4, window_bounds = array<i64: 1, 128>}, {pipeline_mode = #tpu.pipeline_mode<synchronous>, transform_indices = @transform_5, window_bounds = array<i64: 128, 128>}, {pipeline_mode = #tpu.pipeline_mode<synchronous>, transform_indices = @transform_6, window_bounds = array<i64: 1, 128>}, {transform_indices = @transform_7, window_bounds = array<i64: 8, 128>}]} {
    %c0 = arith.constant 0 : index
    %c0_0 = arith.constant 0 : index
    %0 = vector.load %arg1[%c0, %c0_0] : memref<8x128xf32, #tpu.memory_space<vmem>>, vector<8x128xf32>
    %c0_1 = arith.constant 0 : index
    %c0_2 = arith.constant 0 : index
    %1 = vector.load %arg2[%c0_1, %c0_2] : memref<128x128xf32, #tpu.memory_space<vmem>>, vector<128x128xf32>
    %cst = arith.constant dense<0.000000e+00> : vector<8x128xf32>
    %2 = tpu.matmul %0, %1, %cst {dimension_numbers = #tpu.dot_dimension_numbers<[1], [0], [0], [1], [0, 0, 1, 1], [], []>} : vector<8x128xf32>, vector<128x128xf32>, vector<8x128xf32> -> vector<8x128xf32>
    %c0_3 = arith.constant 0 : index
    %c0_4 = arith.constant 0 : index
    %3 = vector.load %arg3[%c0_3, %c0_4] : memref<1x128xf32, #tpu.memory_space<vmem>>, vector<1x128xf32>
    %4 = vector.broadcast %3 : vector<1x128xf32> to vector<8x128xf32>
    %5 = arith.addf %2, %4 : vector<8x128xf32>
    %cst_5 = arith.constant 0.000000e+00 : f32
    %6 = vector.broadcast %cst_5 : f32 to vector<8x128xf32>
    %7 = arith.maximumf %5, %6 : vector<8x128xf32>
    %c0_6 = arith.constant 0 : index
    %c0_7 = arith.constant 0 : index
    %8 = vector.load %arg4[%c0_6, %c0_7] : memref<128x128xf32, #tpu.memory_space<vmem>>, vector<128x128xf32>
    %cst_8 = arith.constant dense<0.000000e+00> : vector<8x128xf32>
    %9 = tpu.matmul %7, %8, %cst_8 {dimension_numbers = #tpu.dot_dimension_numbers<[1], [0], [0], [1], [0, 0, 1, 1], [], []>} : vector<8x128xf32>, vector<128x128xf32>, vector<8x128xf32> -> vector<8x128xf32>
    %c0_9 = arith.constant 0 : index
    %c0_10 = arith.constant 0 : index
    %10 = vector.load %arg5[%c0_9, %c0_10] : memref<1x128xf32, #tpu.memory_space<vmem>>, vector<1x128xf32>
    %11 = vector.broadcast %10 : vector<1x128xf32> to vector<8x128xf32>
    %12 = arith.addf %9, %11 : vector<8x128xf32>
    %cst_11 = arith.constant 0.000000e+00 : f32
    %13 = vector.broadcast %cst_11 : f32 to vector<8x128xf32>
    %14 = arith.maximumf %12, %13 : vector<8x128xf32>
    %c0_12 = arith.constant 0 : index
    %c0_13 = arith.constant 0 : index
    %15 = vector.load %arg6[%c0_12, %c0_13] : memref<128x128xf32, #tpu.memory_space<vmem>>, vector<128x128xf32>
    %cst_14 = arith.constant dense<0.000000e+00> : vector<8x128xf32>
    %16 = tpu.matmul %14, %15, %cst_14 {dimension_numbers = #tpu.dot_dimension_numbers<[1], [0], [0], [1], [0, 0, 1, 1], [], []>} : vector<8x128xf32>, vector<128x128xf32>, vector<8x128xf32> -> vector<8x128xf32>
    %c0_15 = arith.constant 0 : index
    %c0_16 = arith.constant 0 : index
    %17 = vector.load %arg7[%c0_15, %c0_16] : memref<1x128xf32, #tpu.memory_space<vmem>>, vector<1x128xf32>
    %18 = vector.broadcast %17 : vector<1x128xf32> to vector<8x128xf32>
    %19 = arith.addf %16, %18 : vector<8x128xf32>
    %c0_17 = arith.constant 0 : index
    %c0_18 = arith.constant 0 : index
    %20 = vector.load %arg8[%c0_17, %c0_18] : memref<8x128xf32, #tpu.memory_space<vmem>>, vector<8x128xf32>
    tpu.vector_store %arg8[%c0_17, %c0_18], %19 {strides = array<i32>} : memref<8x128xf32, #tpu.memory_space<vmem>>, vector<8x128xf32>,
    return
  }
  func.func @transform_0(%arg0: i32) -> (i32, i32) {
    %c0_i32 = arith.constant 0 : i32
    %c0_i32_0 = arith.constant 0 : i32
    return %arg0, %c0_i32 : i32, i32
  }
  func.func @transform_1(%arg0: i32) -> (i32, i32) {
    %c0_i32 = arith.constant 0 : i32
    %c0_i32_0 = arith.constant 0 : i32
    %c0_i32_1 = arith.constant 0 : i32
    return %c0_i32, %c0_i32_0 : i32, i32
  }
  func.func @transform_2(%arg0: i32) -> (i32, i32) {
    %c0_i32 = arith.constant 0 : i32
    %c0_i32_0 = arith.constant 0 : i32
    %c0_i32_1 = arith.constant 0 : i32
    return %c0_i32, %c0_i32_0 : i32, i32
  }
  func.func @transform_3(%arg0: i32) -> (i32, i32) {
    %c0_i32 = arith.constant 0 : i32
    %c0_i32_0 = arith.constant 0 : i32
    %c0_i32_1 = arith.constant 0 : i32
    return %c0_i32, %c0_i32_0 : i32, i32
  }
  func.func @transform_4(%arg0: i32) -> (i32, i32) {
    %c0_i32 = arith.constant 0 : i32
    %c0_i32_0 = arith.constant 0 : i32
    %c0_i32_1 = arith.constant 0 : i32
    return %c0_i32, %c0_i32_0 : i32, i32
  }
  func.func @transform_5(%arg0: i32) -> (i32, i32) {
    %c0_i32 = arith.constant 0 : i32
    %c0_i32_0 = arith.constant 0 : i32
    %c0_i32_1 = arith.constant 0 : i32
    return %c0_i32, %c0_i32_0 : i32, i32
  }
  func.func @transform_6(%arg0: i32) -> (i32, i32) {
    %c0_i32 = arith.constant 0 : i32
    %c0_i32_0 = arith.constant 0 : i32
    %c0_i32_1 = arith.constant 0 : i32
    return %c0_i32, %c0_i32_0 : i32, i32
  }
  func.func @transform_7(%arg0: i32) -> (i32, i32) {
    %c0_i32 = arith.constant 0 : i32
    %c0_i32_0 = arith.constant 0 : i32
    return %arg0, %c0_i32 : i32, i32
  }
}

</mosaic_0001>

<llo_original>
// kernel: encoder_decoder.1
$region0: #{encoder_decoder.1}
  #allocation0 [shape = 'u32[]', space=smem, size = 0x4, offset = 0x4, fixed_abs, tag = 'smem constant byte address 0x4 - core index']
  #allocation1 [shape = 'u32[144,128]{1,0:T(1,128)}', space=vmem, size = 0x12000, scoped, tag = 'internal scratch']
  %s0 = inlined_call_operand.vmem [shape: f32[8,128], index: 0, kind: input, shape index: {}]
  %s1 = inlined_call_operand.vmem [shape: f32[128,128], index: 1, kind: input, shape index: {}]
  %s2 = inlined_call_operand.vmem [shape: f32[1,128], index: 2, kind: input, shape index: {}]
  %s3 = inlined_call_operand.vmem [shape: f32[128,128], index: 3, kind: input, shape index: {}]
  %s4 = inlined_call_operand.vmem [shape: f32[1,128], index: 4, kind: input, shape index: {}]
  %s5 = inlined_call_operand.vmem [shape: f32[128,128], index: 5, kind: input, shape index: {}]
  %s6 = inlined_call_operand.vmem [shape: f32[1,128], index: 6, kind: input, shape index: {}]
  %s7 = inlined_call_operand.hbm [shape: f32[8,128], index: 7, kind: output, shape index: {}]
  %s8 = sld [smem:[#allocation0]]
  $region38: #{encoder_decoder.1} parent=0
    _
  %s10 = ssub.s32 1, %s8
  %s11 = scalar_select 0, %s10, %s8
  $region1: #{encoder_decoder.1} parent=0
    #allocation2 [shape = 'u8[4096]{0}', space=vmem, size = 0x1000, scoped, tag = 'output window, operand 0, single buffered']
    #allocation3 [shape = 's32[1]{0}', space=sflag, size = 0x4, scoped, tag = 'scoped memory for encoder_decoder.1']
    %12 = vsyncpa [#allocation3], 0
    // Predicated region
    $region2: #{encoder_decoder.1} parent=1 // pred_check
      _
    $region3: #{encoder_decoder.1} parent=1 // pred_check_branch
      %14 = sbr.rel (0) target = $region5
    $region4: #{encoder_decoder.1} parent=1 // pred_region
      _
    $region5: #{encoder_decoder.1} parent=1 // pred_fallthru
      _
    // Predicated region
    $region6: #{encoder_decoder.1} parent=1 // pred_check
      _
    $region7: #{encoder_decoder.1} parent=1 // pred_check_branch
      %16 = sbr.rel (0) target = $region9
    $region8: #{encoder_decoder.1} parent=1 // pred_region
      _
    $region9: #{encoder_decoder.1} parent=1 // pred_fallthru
      _
    // Predicated region
    $region10: #{encoder_decoder.1} parent=1 // pred_check
      _
    $region11: #{encoder_decoder.1} parent=1 // pred_check_branch
      %18 = sbr.rel (0) target = $region13
    $region12: #{encoder_decoder.1} parent=1 // pred_region
      _
    $region13: #{encoder_decoder.1} parent=1 // pred_fallthru
      _
    // Predicated region
    $region14: #{encoder_decoder.1} parent=1 // pred_check
      _
    $region15: #{encoder_decoder.1} parent=1 // pred_check_branch
      %20 = sbr.rel (0) target = $region17
    $region16: #{encoder_decoder.1} parent=1 // pred_region
      _
    $region17: #{encoder_decoder.1} parent=1 // pred_fallthru
      _
    // Predicated region
    $region18: #{encoder_decoder.1} parent=1 // pred_check
      _
    $region19: #{encoder_decoder.1} parent=1 // pred_check_branch
      %22 = sbr.rel (0) target = $region21
    $region20: #{encoder_decoder.1} parent=1 // pred_region
      _
    $region21: #{encoder_decoder.1} parent=1 // pred_fallthru
      _
    // Predicated region
    $region22: #{encoder_decoder.1} parent=1 // pred_check
      _
    $region23: #{encoder_decoder.1} parent=1 // pred_check_branch
      %24 = sbr.rel (0) target = $region25
    $region24: #{encoder_decoder.1} parent=1 // pred_region
      _
    $region25: #{encoder_decoder.1} parent=1 // pred_fallthru
      _
    // Predicated region
    $region26: #{encoder_decoder.1} parent=1 // pred_check
      _
    $region27: #{encoder_decoder.1} parent=1 // pred_check_branch
      %26 = sbr.rel (0) target = $region29
    $region28: #{encoder_decoder.1} parent=1 // pred_region
      _
    $region29: #{encoder_decoder.1} parent=1 // pred_fallthru
      _
    %v27 = vld [vmem:[%s0] sm:$0xff]
    %v28 = vld [vmem:[%s1] sm:$0xff]
    %v29 = vld [vmem:[%s1 + $0x8] sm:$0xff]
    %v30 = vld [vmem:[%s1 + $0x10] sm:$0xff]
    %v31 = vld [vmem:[%s1 + $0x18] sm:$0xff]
    %v32 = vld [vmem:[%s1 + $0x20] sm:$0xff]
    %v33 = vld [vmem:[%s1 + $0x28] sm:$0xff]
    %v34 = vld [vmem:[%s1 + $0x30] sm:$0xff]
    %v35 = vld [vmem:[%s1 + $0x38] sm:$0xff]
    %v36 = vld [vmem:[%s1 + $0x40] sm:$0xff]
    %v37 = vld [vmem:[%s1 + $0x48] sm:$0xff]
    %v38 = vld [vmem:[%s1 + $0x50] sm:$0xff]
    %v39 = vld [vmem:[%s1 + $0x58] sm:$0xff]
    %v40 = vld [vmem:[%s1 + $0x60] sm:$0xff]
    %v41 = vld [vmem:[%s1 + $0x68] sm:$0xff]
    %v42 = vld [vmem:[%s1 + $0x70] sm:$0xff]
    %v43 = vld [vmem:[%s1 + $0x78] sm:$0xff]
    %v44 = vld [vmem:[%s2] sm:$0x1]
    %v46 = vlaneseq
    %v47 = vshrl.u32 %v46, 7
    %v48 = vsub.s32 0, %v47
    %v49 = vrot.slane %v44, %v48
    %51 = vmatprep.subr.mxu0 0.0
    %52 = vmatpush1.msra.mxu0 %v28
    %53 = vmatprep.subr.mxu0 0.0
    %54 = vmatpush1.msra.mxu0 %v29
    %55 = vmatprep.subr.mxu0 0.0
    %56 = vmatpush1.msra.mxu0 %v30
    %57 = vmatprep.subr.mxu0 0.0
    %58 = vmatpush1.msra.mxu0 %v31
    %59 = vmatprep.subr.mxu0 0.0
    %60 = vmatpush1.msra.mxu0 %v32
    %61 = vmatprep.subr.mxu0 0.0
    %62 = vmatpush1.msra.mxu0 %v33
    %63 = vmatprep.subr.mxu0 0.0
    %64 = vmatpush1.msra.mxu0 %v34
    %65 = vmatprep.subr.mxu0 0.0
    %66 = vmatpush1.msra.mxu0 %v35
    %67 = vmatprep.subr.mxu0 0.0
    %68 = vmatpush1.msra.mxu0 %v36
    %69 = vmatprep.subr.mxu0 0.0
    %70 = vmatpush1.msra.mxu0 %v37
    %71 = vmatprep.subr.mxu0 0.0
    %72 = vmatpush1.msra.mxu0 %v38
    %73 = vmatprep.subr.mxu0 0.0
    %74 = vmatpush1.msra.mxu0 %v39
    %75 = vmatprep.subr.mxu0 0.0
    %76 = vmatpush1.msra.mxu0 %v40
    %77 = vmatprep.subr.mxu0 0.0
    %78 = vmatpush1.msra.mxu0 %v41
    %79 = vmatprep.subr.mxu0 0.0
    %80 = vmatpush1.msra.mxu0 %v42
    %81 = vmatprep.subr.mxu0 0.0
    %82 = vmatpush1.msra.mxu0 %v43
    %83 = vmatprep.subr.mxu0 0.0
    %84 = vmatpush1.msra.mxu0 0.0
    %85 = vmatprep.subr.mxu0 0.0
    %86 = vmatpush1.msra.mxu0 0.0
    %87 = vmatprep.subr.mxu0 0.0
    %88 = vmatpush1.msra.mxu0 0.0
    %89 = vmatprep.subr.mxu0 0.0
    %90 = vmatpush1.msra.mxu0 0.0
    %91 = vmatprep.subr.mxu0 0.0
    %92 = vmatpush1.msra.mxu0 0.0
    %93 = vmatprep.subr.mxu0 0.0
    %94 = vmatpush1.msra.mxu0 0.0
    %95 = vmatprep.subr.mxu0 0.0
    %96 = vmatpush1.msra.mxu0 0.0
    %97 = vmatprep.subr.mxu0 0.0
    %98 = vmatpush1.msra.mxu0 0.0
    %99 = vmatprep.subr.mxu0 0.0
    %100 = vmatpush1.msra.mxu0 0.0
    %101 = vmatprep.subr.mxu0 0.0
    %102 = vmatpush1.msra.mxu0 0.0
    %103 = vmatprep.subr.mxu0 0.0
    %104 = vmatpush1.msra.mxu0 0.0
    %105 = vmatprep.subr.mxu0 0.0
    %106 = vmatpush1.msra.mxu0 0.0
    %107 = vmatprep.subr.mxu0 0.0
    %108 = vmatpush1.msra.mxu0 0.0
    %109 = vmatprep.subr.mxu0 0.0
    %110 = vmatpush1.msra.mxu0 0.0
    %111 = vmatprep.subr.mxu0 0.0
    %112 = vmatpush1.msra.mxu0 0.0
    %113 = vmatprep.subr.mxu0 0.0
    %114 = vmatpush1.msra.mxu0 0.0
    %115 = vmatprep.mubr.f32.mxu0 0.0
    %116 = vmatmul.mubr.f32.gmra.mrb[0].mxu0 %v27
    %v117 = vpop.f32.mrb[0].mxu0
    %v118 = vadd.f32 %v49, %v117
    %v119 = vpop.f32.mrb[0].mxu0
    %120 = vdwg.mxu0
    %v121 = vmax.f32 %v118, 0.0
    %v122 = vld [vmem:[%s3] sm:$0xff]
    %v123 = vld [vmem:[%s3 + $0x8] sm:$0xff]
    %v124 = vld [vmem:[%s3 + $0x10] sm:$0xff]
    %v125 = vld [vmem:[%s3 + $0x18] sm:$0xff]
    %v126 = vld [vmem:[%s3 + $0x20] sm:$0xff]
    %v127 = vld [vmem:[%s3 + $0x28] sm:$0xff]
    %v128 = vld [vmem:[%s3 + $0x30] sm:$0xff]
    %v129 = vld [vmem:[%s3 + $0x38] sm:$0xff]
    %v130 = vld [vmem:[%s3 + $0x40] sm:$0xff]
    %v131 = vld [vmem:[%s3 + $0x48] sm:$0xff]
    %v132 = vld [vmem:[%s3 + $0x50] sm:$0xff]
    %v133 = vld [vmem:[%s3 + $0x58] sm:$0xff]
    %v134 = vld [vmem:[%s3 + $0x60] sm:$0xff]
    %v135 = vld [vmem:[%s3 + $0x68] sm:$0xff]
    %v136 = vld [vmem:[%s3 + $0x70] sm:$0xff]
    %v137 = vld [vmem:[%s3 + $0x78] sm:$0xff]
    %v138 = vld [vmem:[%s4] sm:$0x1]
    %v140 = vlaneseq
    %v141 = vshrl.u32 %v140, 7
    %v142 = vsub.s32 0, %v141
    %v143 = vrot.slane %v138, %v142
    %145 = vmatprep.subr.mxu0 0.0
    %146 = vmatpush1.msra.mxu0 %v122
    %147 = vmatprep.subr.mxu0 0.0
    %148 = vmatpush1.msra.mxu0 %v123
    %149 = vmatprep.subr.mxu0 0.0
    %150 = vmatpush1.msra.mxu0 %v124
    %151 = vmatprep.subr.mxu0 0.0
    %152 = vmatpush1.msra.mxu0 %v125
    %153 = vmatprep.subr.mxu0 0.0
    %154 = vmatpush1.msra.mxu0 %v126
    %155 = vmatprep.subr.mxu0 0.0
    %156 = vmatpush1.msra.mxu0 %v127
    %157 = vmatprep.subr.mxu0 0.0
    %158 = vmatpush1.msra.mxu0 %v128
    %159 = vmatprep.subr.mxu0 0.0
    %160 = vmatpush1.msra.mxu0 %v129
    %161 = vmatprep.subr.mxu0 0.0
    %162 = vmatpush1.msra.mxu0 %v130
    %163 = vmatprep.subr.mxu0 0.0
    %164 = vmatpush1.msra.mxu0 %v131
    %165 = vmatprep.subr.mxu0 0.0
    %166 = vmatpush1.msra.mxu0 %v132
    %167 = vmatprep.subr.mxu0 0.0
    %168 = vmatpush1.msra.mxu0 %v133
    %169 = vmatprep.subr.mxu0 0.0
    %170 = vmatpush1.msra.mxu0 %v134
    %171 = vmatprep.subr.mxu0 0.0
    %172 = vmatpush1.msra.mxu0 %v135
    %173 = vmatprep.subr.mxu0 0.0
    %174 = vmatpush1.msra.mxu0 %v136
    %175 = vmatprep.subr.mxu0 0.0
    %176 = vmatpush1.msra.mxu0 %v137
    %177 = vmatprep.subr.mxu0 0.0
    %178 = vmatpush1.msra.mxu0 0.0
    %179 = vmatprep.subr.mxu0 0.0
    %180 = vmatpush1.msra.mxu0 0.0
    %181 = vmatprep.subr.mxu0 0.0
    %182 = vmatpush1.msra.mxu0 0.0
    %183 = vmatprep.subr.mxu0 0.0
    %184 = vmatpush1.msra.mxu0 0.0
    %185 = vmatprep.subr.mxu0 0.0
    %186 = vmatpush1.msra.mxu0 0.0
    %187 = vmatprep.subr.mxu0 0.0
    %188 = vmatpush1.msra.mxu0 0.0
    %189 = vmatprep.subr.mxu0 0.0
    %190 = vmatpush1.msra.mxu0 0.0
    %191 = vmatprep.subr.mxu0 0.0
    %192 = vmatpush1.msra.mxu0 0.0
    %193 = vmatprep.subr.mxu0 0.0
    %194 = vmatpush1.msra.mxu0 0.0
    %195 = vmatprep.subr.mxu0 0.0
    %196 = vmatpush1.msra.mxu0 0.0
    %197 = vmatprep.subr.mxu0 0.0
    %198 = vmatpush1.msra.mxu0 0.0
    %199 = vmatprep.subr.mxu0 0.0
    %200 = vmatpush1.msra.mxu0 0.0
    %201 = vmatprep.subr.mxu0 0.0
    %202 = vmatpush1.msra.mxu0 0.0
    %203 = vmatprep.subr.mxu0 0.0
    %204 = vmatpush1.msra.mxu0 0.0
    %205 = vmatprep.subr.mxu0 0.0
    %206 = vmatpush1.msra.mxu0 0.0
    %207 = vmatprep.subr.mxu0 0.0
    %208 = vmatpush1.msra.mxu0 0.0
    %209 = vmatprep.mubr.f32.mxu0 0.0
    %210 = vmatmul.mubr.f32.gmra.mrb[0].mxu0 %v121
    %v211 = vpop.f32.mrb[0].mxu0
    %v212 = vadd.f32 %v143, %v211
    %v213 = vpop.f32.mrb[0].mxu0
    %214 = vdwg.mxu0
    %v215 = vmax.f32 %v212, 0.0
    %v216 = vld [vmem:[%s5] sm:$0xff]
    %v217 = vld [vmem:[%s5 + $0x8] sm:$0xff]
    %v218 = vld [vmem:[%s5 + $0x10] sm:$0xff]
    %v219 = vld [vmem:[%s5 + $0x18] sm:$0xff]
    %v220 = vld [vmem:[%s5 + $0x20] sm:$0xff]
    %v221 = vld [vmem:[%s5 + $0x28] sm:$0xff]
    %v222 = vld [vmem:[%s5 + $0x30] sm:$0xff]
    %v223 = vld [vmem:[%s5 + $0x38] sm:$0xff]
    %v224 = vld [vmem:[%s5 + $0x40] sm:$0xff]
    %v225 = vld [vmem:[%s5 + $0x48] sm:$0xff]
    %v226 = vld [vmem:[%s5 + $0x50] sm:$0xff]
    %v227 = vld [vmem:[%s5 + $0x58] sm:$0xff]
    %v228 = vld [vmem:[%s5 + $0x60] sm:$0xff]
    %v229 = vld [vmem:[%s5 + $0x68] sm:$0xff]
    %v230 = vld [vmem:[%s5 + $0x70] sm:$0xff]
    %v231 = vld [vmem:[%s5 + $0x78] sm:$0xff]
    %v232 = vld [vmem:[%s6] sm:$0x1]
    %v234 = vlaneseq
    %v235 = vshrl.u32 %v234, 7
    %v236 = vsub.s32 0, %v235
    %v237 = vrot.slane %v232, %v236
    %239 = vmatprep.subr.mxu0 0.0
    %240 = vmatpush1.msra.mxu0 %v216
    %241 = vmatprep.subr.mxu0 0.0
    %242 = vmatpush1.msra.mxu0 %v217
    %243 = vmatprep.subr.mxu0 0.0
    %244 = vmatpush1.msra.mxu0 %v218
    %245 = vmatprep.subr.mxu0 0.0
    %246 = vmatpush1.msra.mxu0 %v219
    %247 = vmatprep.subr.mxu0 0.0
    %248 = vmatpush1.msra.mxu0 %v220
    %249 = vmatprep.subr.mxu0 0.0
    %250 = vmatpush1.msra.mxu0 %v221
    %251 = vmatprep.subr.mxu0 0.0
    %252 = vmatpush1.msra.mxu0 %v222
    %253 = vmatprep.subr.mxu0 0.0
    %254 = vmatpush1.msra.mxu0 %v223
    %255 = vmatprep.subr.mxu0 0.0
    %256 = vmatpush1.msra.mxu0 %v224
    %257 = vmatprep.subr.mxu0 0.0
    %258 = vmatpush1.msra.mxu0 %v225
    %259 = vmatprep.subr.mxu0 0.0
    %260 = vmatpush1.msra.mxu0 %v226
    %261 = vmatprep.subr.mxu0 0.0
    %262 = vmatpush1.msra.mxu0 %v227
    %263 = vmatprep.subr.mxu0 0.0
    %264 = vmatpush1.msra.mxu0 %v228
    %265 = vmatprep.subr.mxu0 0.0
    %266 = vmatpush1.msra.mxu0 %v229
    %267 = vmatprep.subr.mxu0 0.0
    %268 = vmatpush1.msra.mxu0 %v230
    %269 = vmatprep.subr.mxu0 0.0
    %270 = vmatpush1.msra.mxu0 %v231
    %271 = vmatprep.subr.mxu0 0.0
    %272 = vmatpush1.msra.mxu0 0.0
    %273 = vmatprep.subr.mxu0 0.0
    %274 = vmatpush1.msra.mxu0 0.0
    %275 = vmatprep.subr.mxu0 0.0
    %276 = vmatpush1.msra.mxu0 0.0
    %277 = vmatprep.subr.mxu0 0.0
    %278 = vmatpush1.msra.mxu0 0.0
    %279 = vmatprep.subr.mxu0 0.0
    %280 = vmatpush1.msra.mxu0 0.0
    %281 = vmatprep.subr.mxu0 0.0
    %282 = vmatpush1.msra.mxu0 0.0
    %283 = vmatprep.subr.mxu0 0.0
    %284 = vmatpush1.msra.mxu0 0.0
    %285 = vmatprep.subr.mxu0 0.0
    %286 = vmatpush1.msra.mxu0 0.0
    %287 = vmatprep.subr.mxu0 0.0
    %288 = vmatpush1.msra.mxu0 0.0
    %289 = vmatprep.subr.mxu0 0.0
    %290 = vmatpush1.msra.mxu0 0.0
    %291 = vmatprep.subr.mxu0 0.0
    %292 = vmatpush1.msra.mxu0 0.0
    %293 = vmatprep.subr.mxu0 0.0
    %294 = vmatpush1.msra.mxu0 0.0
    %295 = vmatprep.subr.mxu0 0.0
    %296 = vmatpush1.msra.mxu0 0.0
    %297 = vmatprep.subr.mxu0 0.0
    %298 = vmatpush1.msra.mxu0 0.0
    %299 = vmatprep.subr.mxu0 0.0
    %300 = vmatpush1.msra.mxu0 0.0
    %301 = vmatprep.subr.mxu0 0.0
    %302 = vmatpush1.msra.mxu0 0.0
    %303 = vmatprep.mubr.f32.mxu0 0.0
    %304 = vmatmul.mubr.f32.gmra.mrb[0].mxu0 %v215
    %v305 = vpop.f32.mrb[0].mxu0
    %v306 = vadd.f32 %v237, %v305
    %v307 = vpop.f32.mrb[0].mxu0
    %308 = vdwg.mxu0
    %309 = vst [vmem:[#allocation2] sm:$0xff] %v306
    // Predicated region
    $region30: #{encoder_decoder.1} parent=1 // pred_check
      _
    $region31: #{encoder_decoder.1} parent=1 // pred_check_branch
      %311 = sbr.rel (0) target = $region33
    $region32: #{encoder_decoder.1} parent=1 // pred_region
      %s313 = ssub.s32 128, 128
      %314 = vsyncadd [#allocation3], %s313
      %s316 = sshll.u32 [#allocation2], 4
      %s317 = int_to_ptr.vmem [resolvable:$true] %s316
      %319 = dma.vmem_to_hbm [thread:$0]  %s317, 128, %s7, [#allocation3]
    $region33: #{encoder_decoder.1} parent=1 // pred_fallthru
      _
    // Predicated region
    $region34: #{encoder_decoder.1} parent=1 // pred_check
      _
    $region35: #{encoder_decoder.1} parent=1 // pred_check_branch
      %321 = sbr.rel (0) target = $region37
    $region36: #{encoder_decoder.1} parent=1 // pred_region
      %322 = dma.done [#allocation3], 128
    $region37: #{encoder_decoder.1} parent=1 // pred_fallthru
      _
    %323 = vsyncpa [#allocation3], 1

</llo_original>
